<compile_context>
chip_gen: v6e
topology: v6e:2x2x1
jax: 0.10.0
libtpu: 0.0.40
codegen_flags: <defaults>
</compile_context>

<pallas_src>
import functools
import math

import jax
import jax.numpy as jnp
from jax.experimental import pallas as pl
from jax.experimental.pallas import tpu as pltpu


def _round_up(x, m):
    return (x + m - 1) // m * m


# ----------------------------------------------------------------------------
# Tiled linear kernel: y = x @ W + b (+ optional ReLU)
# ----------------------------------------------------------------------------
def _linear_kernel(x_ref, w_ref, b_ref, o_ref, acc_ref, *, activation):
    @pl.when(pl.program_id(2) == 0)
    def _():
        acc_ref[...] = jnp.zeros_like(acc_ref)

    acc_ref[...] += jnp.dot(x_ref[...], w_ref[...],
                            preferred_element_type=jnp.float32)

    @pl.when(pl.program_id(2) == pl.num_programs(2) - 1)
    def _():
        y = acc_ref[...] + b_ref[...]
        if activation == "relu":
            y = jnp.maximum(y, 0.0)
        o_ref[...] = y.astype(o_ref.dtype)


def linear(x, w, b, activation="none", out_dtype=jnp.float32,
           tm=256, tn=512, tk=512):
    """x: [M, K] (any float dtype), w: [K, N], b: [N] -> [M, N].

    bf16 is fed to the MXU; accumulation is f32. M/N/K are padded (zeros) up to
    the chosen tile multiples so blocks always satisfy the (8, 128) constraint.
    """
    M, K = x.shape
    N = w.shape[1]
    tm = min(tm, _round_up(M, 8))
    tn = min(tn, _round_up(N, 128))
    tk = min(tk, _round_up(K, 128))
    Mp, Kp, Np = _round_up(M, tm), _round_up(K, tk), _round_up(N, tn)

    xb = x.astype(jnp.bfloat16)
    wb = w.astype(jnp.bfloat16)
    if (Mp, Kp) != (M, K):
        xb = jnp.pad(xb, ((0, Mp - M), (0, Kp - K)))
    if (Kp, Np) != (K, N):
        wb = jnp.pad(wb, ((0, Kp - K), (0, Np - N)))
    bb = b.astype(jnp.float32).reshape(1, N)
    if Np != N:
        bb = jnp.pad(bb, ((0, 0), (0, Np - N)))

    out = pl.pallas_call(
        functools.partial(_linear_kernel, activation=activation),
        out_shape=jax.ShapeDtypeStruct((Mp, Np), out_dtype),
        grid=(Mp // tm, Np // tn, Kp // tk),
        in_specs=[
            pl.BlockSpec((tm, tk), lambda i, j, k: (i, k)),
            pl.BlockSpec((tk, tn), lambda i, j, k: (k, j)),
            pl.BlockSpec((1, tn), lambda i, j, k: (0, j)),
        ],
        out_specs=pl.BlockSpec((tm, tn), lambda i, j, k: (i, j)),
        scratch_shapes=[pltpu.VMEM((tm, tn), jnp.float32)],
        compiler_params=pltpu.CompilerParams(
            dimension_semantics=("parallel", "parallel", "arbitrary"),
            vmem_limit_bytes=32 * 1024 * 1024),
    )(xb, wb, bb)

    if (Mp, Np) != (M, N):
        out = out[:M, :N]
    return out


# ----------------------------------------------------------------------------
# Fused: (x @ W + b) + residual -> LayerNorm   (post-LN epilogue of att / FF)
# ----------------------------------------------------------------------------
def _proj_add_ln_kernel(x_ref, w_ref, b_ref, r_ref, g_ref, be_ref, o_ref, *, eps):
    y = jnp.dot(x_ref[...], w_ref[...], preferred_element_type=jnp.float32)
    z = y + b_ref[...] + r_ref[...]
    mu = jnp.mean(z, axis=-1, keepdims=True)
    var = jnp.mean((z - mu) ** 2, axis=-1, keepdims=True)
    zn = (z - mu) * jax.lax.rsqrt(var + eps)
    o_ref[...] = (zn * g_ref[...] + be_ref[...]).astype(o_ref.dtype)


def proj_add_layernorm(x, w, b, residual, gamma, beta, eps=1e-5, tm=256):
    """out = LayerNorm(x @ W + b + residual).  x: [M, K], W: [K, D], residual: [M, D]."""
    M, K = x.shape
    D = w.shape[1]
    tm = min(tm, _round_up(M, 8))
    Mp = _round_up(M, tm)

    xb = x.astype(jnp.bfloat16)
    wb = w.astype(jnp.bfloat16)
    rb = residual.astype(jnp.float32)
    if Mp != M:
        xb = jnp.pad(xb, ((0, Mp - M), (0, 0)))
        rb = jnp.pad(rb, ((0, Mp - M), (0, 0)))

    out = pl.pallas_call(
        functools.partial(_proj_add_ln_kernel, eps=eps),
        out_shape=jax.ShapeDtypeStruct((Mp, D), jnp.float32),
        grid=(Mp // tm,),
        in_specs=[
            pl.BlockSpec((tm, K), lambda i: (i, 0)),
            pl.BlockSpec((K, D), lambda i: (0, 0)),
            pl.BlockSpec((1, D), lambda i: (0, 0)),
            pl.BlockSpec((tm, D), lambda i: (i, 0)),
            pl.BlockSpec((1, D), lambda i: (0, 0)),
            pl.BlockSpec((1, D), lambda i: (0, 0)),
        ],
        out_specs=pl.BlockSpec((tm, D), lambda i: (i, 0)),
        compiler_params=pltpu.CompilerParams(
            dimension_semantics=("parallel",),
            vmem_limit_bytes=32 * 1024 * 1024),
    )(xb, wb, b.astype(jnp.float32).reshape(1, D), rb,
      gamma.astype(jnp.float32).reshape(1, D),
      beta.astype(jnp.float32).reshape(1, D))

    return out[:M] if Mp != M else out


# ----------------------------------------------------------------------------
# Fused masked multi-head attention: grid=(B,), all heads per grid step.
# Inputs are head-packed along the lane axis ([.., H*Dh]); mask is a per-batch
# additive f32 bias (-1e9 where disallowed) — no H× duplication, no transposes.
# ----------------------------------------------------------------------------
def _mha_compute(q_full, kv_full, bias, o_ref, p_ref, *,
                 n_heads, head_dim, scale, q_off, k_off, v_off):
    ctx_parts = []
    for h in range(n_heads):
        q = q_full[:, q_off + h * head_dim: q_off + (h + 1) * head_dim]
        k = kv_full[:, k_off + h * head_dim: k_off + (h + 1) * head_dim]
        v = kv_full[:, v_off + h * head_dim: v_off + (h + 1) * head_dim]
        s = jnp.dot(q, k.T, preferred_element_type=jnp.float32) * scale + bias
        s_max = jnp.max(s, axis=-1, keepdims=True)
        e = jnp.exp(s - s_max)
        p = e * pl.reciprocal(jnp.sum(e, axis=-1, keepdims=True), approx=True)
        p_ref[0, h] = p
        ctx_parts.append(jnp.dot(p.astype(v.dtype), v,
                                 preferred_element_type=jnp.float32))
    o_ref[0] = jnp.concatenate(ctx_parts, axis=-1).astype(o_ref.dtype)


def _mha_self_kernel(qkv_ref, b_ref, o_ref, p_ref, *, n_heads, head_dim, scale, inner):
    full = qkv_ref[0]                      # (L, 3*inner) — single DMA per step
    _mha_compute(full, full, b_ref[0], o_ref, p_ref,
                 n_heads=n_heads, head_dim=head_dim, scale=scale,
                 q_off=0, k_off=inner, v_off=2 * inner)


def _mha_cross_kernel(q_ref, kv_ref, b_ref, o_ref, p_ref, *, n_heads, head_dim, scale, inner):
    _mha_compute(q_ref[0], kv_ref[0], b_ref[0], o_ref, p_ref,
                 n_heads=n_heads, head_dim=head_dim, scale=scale,
                 q_off=0, k_off=0, v_off=inner)


def masked_attention_self(qkv, bias, n_heads, head_dim):
    """qkv: [B, L, 3*H*Dh] bf16, bias: [B, L, L] f32 additive mask."""
    B, L, three_inner = qkv.shape
    inner = n_heads * head_dim
    kern = functools.partial(_mha_self_kernel, n_heads=n_heads, head_dim=head_dim,
                             scale=1.0 / math.sqrt(head_dim), inner=inner)
    return pl.pallas_call(
        kern,
        out_shape=(jax.ShapeDtypeStruct((B, L, inner), jnp.bfloat16),
                   jax.ShapeDtypeStruct((B, n_heads, L, L), jnp.float32)),
        grid=(B,),
        in_specs=[
            pl.BlockSpec((1, L, three_inner), lambda b: (b, 0, 0)),
            pl.BlockSpec((1, L, L), lambda b: (b, 0, 0)),
        ],
        out_specs=(
            pl.BlockSpec((1, L, inner), lambda b: (b, 0, 0)),
            pl.BlockSpec((1, n_heads, L, L), lambda b: (b, 0, 0, 0)),
        ),
        compiler_params=pltpu.CompilerParams(dimension_semantics=("parallel",)),
    )(qkv, bias)


def masked_attention_cross(q, kv, bias, n_heads, head_dim):
    """q: [B, Lq, H*Dh] bf16, kv: [B, Lk, 2*H*Dh] bf16, bias: [B, Lq, Lk] f32."""
    B, Lq, inner = q.shape
    Lk = kv.shape[1]
    kern = functools.partial(_mha_cross_kernel, n_heads=n_heads, head_dim=head_dim,
                             scale=1.0 / math.sqrt(head_dim), inner=inner)
    return pl.pallas_call(
        kern,
        out_shape=(jax.ShapeDtypeStruct((B, Lq, inner), jnp.bfloat16),
                   jax.ShapeDtypeStruct((B, n_heads, Lq, Lk), jnp.float32)),
        grid=(B,),
        in_specs=[
            pl.BlockSpec((1, Lq, inner), lambda b: (b, 0, 0)),
            pl.BlockSpec((1, Lk, 2 * inner), lambda b: (b, 0, 0)),
            pl.BlockSpec((1, Lq, Lk), lambda b: (b, 0, 0)),
        ],
        out_specs=(
            pl.BlockSpec((1, Lq, inner), lambda b: (b, 0, 0)),
            pl.BlockSpec((1, n_heads, Lq, Lk), lambda b: (b, 0, 0, 0)),
        ),
        compiler_params=pltpu.CompilerParams(dimension_semantics=("parallel",)),
    )(q, kv, bias)


# ----------------------------------------------------------------------------
# Transformer building blocks (glue around the Pallas kernels)
# ----------------------------------------------------------------------------
def self_attention_block(x, mask_bias, p, n_heads, head_dim):
    """Post-LN self-attention. x: [B, L, D], mask_bias: [B, L, L] f32."""
    B, L, D = x.shape
    inner = n_heads * head_dim
    x2 = x.reshape(B * L, D)
    qkv = linear(x2, p["wqkv"], p["bqkv"], out_dtype=jnp.bfloat16)   # fused QKV
    qkv = qkv.reshape(B, L, 3 * inner)
    ctx, prob = masked_attention_self(qkv, mask_bias, n_heads, head_dim)
    out = proj_add_layernorm(ctx.reshape(B * L, inner), p["wo"], p["bo"],
                             x2, p["ln_g"], p["ln_b"])
    return out.reshape(B, L, D), prob


def cross_attention_block(x, src, mask_bias, p, n_heads, head_dim):
    """Post-LN cross-attention. x: [B, Lq, D], src: [B, Lk, D]."""
    B, Lq, D = x.shape
    Lk = src.shape[1]
    inner = n_heads * head_dim
    x2 = x.reshape(B * Lq, D)
    s2 = src.reshape(B * Lk, D)
    q = linear(x2, p["wq"], p["bq"], out_dtype=jnp.bfloat16).reshape(B, Lq, inner)
    kv = linear(s2, p["wkv"], p["bkv"], out_dtype=jnp.bfloat16).reshape(B, Lk, 2 * inner)
    ctx, prob = masked_attention_cross(q, kv, mask_bias, n_heads, head_dim)
    out = proj_add_layernorm(ctx.reshape(B * Lq, inner), p["wo"], p["bo"],
                             x2, p["ln_g"], p["ln_b"])
    return out.reshape(B, Lq, D), prob


def residual_ff(x, p):
    """Post-LN position-wise feed-forward. x: [B, L, D]."""
    B, L, D = x.shape
    x2 = x.reshape(B * L, D)
    h = linear(x2, p["w1"], p["b1"], activation="relu", out_dtype=jnp.bfloat16)
    out = proj_add_layernorm(h, p["w2"], p["b2"], x2, p["ln_g"], p["ln_b"])
    return out.reshape(B, L, D)


def embed(tokens, word_emb, pos_emb):
    """tokens: [B, L] int32 -> [B, L, D]  (word_emb * sqrt(D) + pos_emb)."""
    D = word_emb.shape[1]
    L = tokens.shape[1]
    e = jnp.take(word_emb, tokens, axis=0) * math.sqrt(D)
    return e + pos_emb[None, :L, :]


# ----------------------------------------------------------------------------
# Mask construction (mirrors BaseNetwork.get_mask / DecoderNetwork.tgt_to_src_mask)
# ----------------------------------------------------------------------------
def length_pad_mask(lens, L):
    """True where position is padding (mask_lengths(..., reverse=True))."""
    return jnp.arange(L)[None, :] >= lens[:, None]


def decoder_self_mask(tgt_len, Lt):
    pad = length_pad_mask(tgt_len, Lt)                        # [B, Lt]
    causal = jnp.triu(jnp.ones((Lt, Lt), jnp.bool_), k=1)     # strictly upper
    return (pad[:, None, :] | causal[None])                   # [B, Lt, Lt]


def tgt_to_src_mask(src_len, Ls, Lt):
    pad = length_pad_mask(src_len, Ls)                        # [B, Ls]
    return jnp.broadcast_to(pad[:, None, :], (pad.shape[0], Lt, Ls))


# ----------------------------------------------------------------------------
# Parameter initialization (deterministic, synthetic)
# ----------------------------------------------------------------------------
def init_self_att(key, hidden, n_heads, head_dim):
    inner = n_heads * head_dim
    k1, k2 = jax.random.split(key)
    std = 0.02
    return {
        "wqkv": jax.random.normal(k1, (hidden, 3 * inner), jnp.float32) * std,
        "bqkv": jnp.zeros((3 * inner,), jnp.float32),
        "wo": jax.random.normal(k2, (inner, hidden), jnp.float32) * std,
        "bo": jnp.zeros((hidden,), jnp.float32),
        "ln_g": jnp.ones((hidden,), jnp.float32),
        "ln_b": jnp.zeros((hidden,), jnp.float32),
    }


def init_cross_att(key, hidden, n_heads, head_dim):
    inner = n_heads * head_dim
    k1, k2, k3 = jax.random.split(key, 3)
    std = 0.02
    return {
        "wq": jax.random.normal(k1, (hidden, inner), jnp.float32) * std,
        "bq": jnp.zeros((inner,), jnp.float32),
        "wkv": jax.random.normal(k2, (hidden, 2 * inner), jnp.float32) * std,
        "bkv": jnp.zeros((2 * inner,), jnp.float32),
        "wo": jax.random.normal(k3, (inner, hidden), jnp.float32) * std,
        "bo": jnp.zeros((hidden,), jnp.float32),
        "ln_g": jnp.ones((hidden,), jnp.float32),
        "ln_b": jnp.zeros((hidden,), jnp.float32),
    }


def init_ff(key, hidden, proj):
    k1, k2 = jax.random.split(key)
    std = 0.02
    return {
        "w1": jax.random.normal(k1, (hidden, proj), jnp.float32) * std,
        "b1": jnp.zeros((proj,), jnp.float32),
        "w2": jax.random.normal(k2, (proj, hidden), jnp.float32) * std,
        "b2": jnp.zeros((hidden,), jnp.float32),
        "ln_g": jnp.ones((hidden,), jnp.float32),
        "ln_b": jnp.zeros((hidden,), jnp.float32),
    }


def init_decoder_network(key, cfg):
    D, H, Dh, P = cfg["hidden"], cfg["n_heads"], cfg["head_dim"], cfg["proj"]
    k_we, k_pe, k_layers = jax.random.split(key, 3)
    params = {
        "word_emb": jax.random.normal(k_we, (cfg["vocab_size"], D), jnp.float32) * 0.02,
        "pos_emb": jax.random.normal(k_pe, (cfg["seq_len"], D), jnp.float32) * 0.02,
        "layers": [],
    }
    for k in jax.random.split(k_layers, cfg["n_layers"]):
        params["layers"].append({
            "self_att": init_self_att(jax.random.fold_in(k, 0), D, H, Dh),
            "cross_att": init_cross_att(jax.random.fold_in(k, 1), D, H, Dh),
            "ff": init_ff(jax.random.fold_in(k, 2), D, P),
        })
    return params


# ----------------------------------------------------------------------------
# DecoderNetwork.forward
# ----------------------------------------------------------------------------
def decoder_network_forward(params, cfg, src, tgt, mem, tgt_mask, t2s_mask):
    """src: [B, Ls, D] hidden states, tgt: [B, Lt] int32, mem: None,
    tgt_mask: [B, Lt, Lt] bool (True = masked), t2s_mask: [B, Lt, Ls] bool."""
    H, Dh = cfg["n_heads"], cfg["head_dim"]

    # additive mask biases, built once and shared by every layer (no H× duplication)
    tgt_bias = tgt_mask.astype(jnp.float32) * (-1e9)
    t2s_bias = t2s_mask.astype(jnp.float32) * (-1e9)

    out = embed(tgt, params["word_emb"], params["pos_emb"])     # dropout = no-op (eval)

    new_mems, self_att_probs, inter_att_probs = [], [], []
    for lp in params["layers"]:
        new_mems.append(out)   # new memory = layer input (mem is None)
        out, sp = self_attention_block(out, tgt_bias, lp["self_att"], H, Dh)
        out, ip = cross_attention_block(out, src, t2s_bias, lp["cross_att"], H, Dh)
        out = residual_ff(out, lp["ff"])
        self_att_probs.append(sp)
        inter_att_probs.append(ip)

    return out, new_mems, self_att_probs, inter_att_probs


# ----------------------------------------------------------------------------
# Main
# ----------------------------------------------------------------------------
if __name__ == "__main__":
    cfg = dict(
        vocab_size=60,
        seq_len=8,
        hidden=32,
        proj=64,
        n_heads=2,
        head_dim=16,
        n_layers=2,
        padding_index=0,
    )
    B = 2
    Lt = cfg["seq_len"]
    Ls = cfg["seq_len"]
    D = cfg["hidden"]

    key = jax.random.PRNGKey(0)
    k_param, k_src, k_tgt = jax.random.split(key, 3)
    params = init_decoder_network(k_param, cfg)

    src_len = jnp.array([8, 6], dtype=jnp.int32)
    tgt_len = jnp.array([8, 5], dtype=jnp.int32)

    # src: final hidden states from the source side (given directly, per forward spec)
    src = jax.random.normal(k_src, (B, Ls, D), jnp.float32)
    # tgt: target token indices, padded beyond tgt_len
    tgt = jax.random.randint(k_tgt, (B, Lt), 1, cfg["vocab_size"], dtype=jnp.int32)
    tgt = jnp.where(length_pad_mask(tgt_len, Lt), cfg["padding_index"], tgt)

    tgt_mask = decoder_self_mask(tgt_len, Lt)          # [B, Lt, Lt], True = masked
    t2s_mask = tgt_to_src_mask(src_len, Ls, Lt)        # [B, Lt, Ls], True = masked

    out, new_mems, self_att_probs, inter_att_probs = decoder_network_forward(
        params, cfg, src, tgt, None, tgt_mask, t2s_mask)
    jax.block_until_ready(out)

    assert out.shape == (B, Lt, D)
    assert len(new_mems) == cfg["n_layers"]
    assert new_mems[0].shape == (B, Lt, D)
    assert self_att_probs[0].shape == (B, cfg["n_heads"], Lt, Lt)
    assert inter_att_probs[0].shape == (B, cfg["n_heads"], Lt, Ls)
    assert bool(jnp.all(jnp.isfinite(out)))
    print("KERNEL_OK")
</pallas_src>

<mosaic_0001>
module attributes {stable_mosaic.version = 11 : i64} {
  func.func @_linear_kernel(%arg0: i32, %arg1: i32, %arg2: i32, %arg3: memref<16x128xbf16, #tpu.memory_space<vmem>>, %arg4: memref<128x128xbf16, #tpu.memory_space<vmem>>, %arg5: memref<1x128xf32, #tpu.memory_space<vmem>>, %arg6: memref<16x128xbf16, #tpu.memory_space<vmem>>, %arg7: memref<16x128xf32, #tpu.memory_space<vmem>>) attributes {dimension_semantics = [#tpu.dimension_semantics<parallel>, #tpu.dimension_semantics<parallel>, #tpu.dimension_semantics<arbitrary>], iteration_bounds = array<i64: 1, 1, 1>, scalar_prefetch = 0 : i64, scratch_operands = 1 : i64, tpu.core_type = #tpu.core_type<tc>, window_params = [{transform_indices = @transform_0, window_bounds = array<i64: 16, 128>}, {transform_indices = @transform_1, window_bounds = array<i64: 128, 128>}, {transform_indices = @transform_2, window_bounds = array<i64: 1, 128>}, {transform_indices = @transform_3, window_bounds = array<i64: 16, 128>}]} {
    %c0_i32 = arith.constant 0 : i32
    %0 = arith.cmpi eq, %arg2, %c0_i32 : i32
    %1 = arith.extui %0 : i1 to i32
    %c0_i32_0 = arith.constant 0 : i32
    %2 = arith.cmpi ne, %1, %c0_i32_0 : i32
    scf.if %2 {
      %cst_10 = arith.constant 0.000000e+00 : f32
      %12 = vector.broadcast %cst_10 : f32 to vector<16x128xf32>
      %c0_11 = arith.constant 0 : index
      %c0_12 = arith.constant 0 : index
      %13 = vector.load %arg7[%c0_11, %c0_12] : memref<16x128xf32, #tpu.memory_space<vmem>>, vector<16x128xf32>
      tpu.vector_store %arg7[%c0_11, %c0_12], %12 {strides = array<i32>} : memref<16x128xf32, #tpu.memory_space<vmem>>, vector<16x128xf32>,
    } else {
    }
    %c0 = arith.constant 0 : index
    %c0_1 = arith.constant 0 : index
    %3 = vector.load %arg7[%c0, %c0_1] : memref<16x128xf32, #tpu.memory_space<vmem>>, vector<16x128xf32>
    %c0_2 = arith.constant 0 : index
    %c0_3 = arith.constant 0 : index
    %4 = vector.load %arg3[%c0_2, %c0_3] : memref<16x128xbf16, #tpu.memory_space<vmem>>, vector<16x128xbf16>
    %c0_4 = arith.constant 0 : index
    %c0_5 = arith.constant 0 : index
    %5 = vector.load %arg4[%c0_4, %c0_5] : memref<128x128xbf16, #tpu.memory_space<vmem>>, vector<128x128xbf16>
    %cst = arith.constant dense<0.000000e+00> : vector<16x128xf32>
    %6 = tpu.matmul %4, %5, %cst {dimension_numbers = #tpu.dot_dimension_numbers<[1], [0], [0], [1], [0, 0, 1, 1], [], []>} : vector<16x128xbf16>, vector<128x128xbf16>, vector<16x128xf32> -> vector<16x128xf32>
    %7 = arith.addf %3, %6 : vector<16x128xf32>
    %c0_6 = arith.constant 0 : index
    %c0_7 = arith.constant 0 : index
    %8 = vector.load %arg7[%c0_6, %c0_7] : memref<16x128xf32, #tpu.memory_space<vmem>>, vector<16x128xf32>
    tpu.vector_store %arg7[%c0_6, %c0_7], %7 {strides = array<i32>} : memref<16x128xf32, #tpu.memory_space<vmem>>, vector<16x128xf32>,
    %c0_i32_8 = arith.constant 0 : i32
    %9 = arith.cmpi eq, %arg2, %c0_i32_8 : i32
    %10 = arith.extui %9 : i1 to i32
    %c0_i32_9 = arith.constant 0 : i32
    %11 = arith.cmpi ne, %10, %c0_i32_9 : i32
    scf.if %11 {
      %c0_10 = arith.constant 0 : index
      %c0_11 = arith.constant 0 : index
      %12 = vector.load %arg7[%c0_10, %c0_11] : memref<16x128xf32, #tpu.memory_space<vmem>>, vector<16x128xf32>
      %c0_12 = arith.constant 0 : index
      %c0_13 = arith.constant 0 : index
      %13 = vector.load %arg5[%c0_12, %c0_13] : memref<1x128xf32, #tpu.memory_space<vmem>>, vector<1x128xf32>
      %14 = vector.broadcast %13 : vector<1x128xf32> to vector<16x128xf32>
      %15 = arith.addf %12, %14 : vector<16x128xf32>
      %16 = arith.truncf %15 : vector<16x128xf32> to vector<16x128xbf16>
      %c0_14 = arith.constant 0 : index
      %c0_15 = arith.constant 0 : index
      %17 = vector.load %arg6[%c0_14, %c0_15] : memref<16x128xbf16, #tpu.memory_space<vmem>>, vector<16x128xbf16>
      tpu.vector_store %arg6[%c0_14, %c0_15], %16 {strides = array<i32>} : memref<16x128xbf16, #tpu.memory_space<vmem>>, vector<16x128xbf16>,
    } else {
    }
    return
  }
  func.func @transform_0(%arg0: i32, %arg1: i32, %arg2: i32) -> (i32, i32) {
    %c0_i32 = arith.constant 0 : i32
    return %arg0, %arg2 : i32, i32
  }
  func.func @transform_1(%arg0: i32, %arg1: i32, %arg2: i32) -> (i32, i32) {
    %c0_i32 = arith.constant 0 : i32
    return %arg2, %arg1 : i32, i32
  }
  func.func @transform_2(%arg0: i32, %arg1: i32, %arg2: i32) -> (i32, i32) {
    %c0_i32 = arith.constant 0 : i32
    %c0_i32_0 = arith.constant 0 : i32
    return %c0_i32, %arg1 : i32, i32
  }
  func.func @transform_3(%arg0: i32, %arg1: i32, %arg2: i32) -> (i32, i32) {
    %c0_i32 = arith.constant 0 : i32
    return %arg0, %arg1 : i32, i32
  }
}

</mosaic_0001>

<llo_original>
// kernel: tpu_custom_call.1
$region0: #{tpu_custom_call.1}
  #allocation0 [shape = 'u32[]', space=smem, size = 0x4, offset = 0x4, fixed_abs, tag = 'smem constant byte address 0x4 - core index']
  #allocation1 [shape = 'u32[144,128]{1,0:T(1,128)}', space=vmem, size = 0x12000, scoped, tag = 'internal scratch']
  #allocation2 [shape = 'f32[16,128]{1,0:T(8,128)}', space=vmem, size = 0x2000, scoped, tag = 'scratch operand']
  %s0 = inlined_call_operand.hbm [shape: bf16[16,128], index: 0, kind: input, shape index: {}]
  %s1 = inlined_call_operand.hbm [shape: bf16[128,128], index: 1, kind: input, shape index: {}]
  %s2 = inlined_call_operand.vmem [shape: f32[1,128], index: 2, kind: input, shape index: {}]
  %s3 = inlined_call_operand.hbm [shape: bf16[16,128], index: 3, kind: output, shape index: {}]
  %s4 = sld [smem:[#allocation0]]
  $region38: #{tpu_custom_call.1} parent=0
    _
  %s6 = ssub.s32 1, %s4
  %s7 = scalar_select 0, %s6, %s4
  $region1: #{tpu_custom_call.1} parent=0
    #allocation3 [shape = 'u8[4096]{0}', space=vmem, size = 0x1000, scoped, tag = 'input window, operand 0, single buffered']
    #allocation4 [shape = 's32[1]{0}', space=sflag, size = 0x4, scoped, tag = 'scoped memory for tpu_custom_call.1']
    #allocation5 [shape = 's32[1]{0}', space=sflag, size = 0x4, scoped, tag = 'scoped memory for tpu_custom_call.1']
    #allocation6 [shape = 'u8[32768]{0}', space=vmem, size = 0x8000, scoped, tag = 'input window, operand 1, single buffered']
    #allocation7 [shape = 's32[1]{0}', space=sflag, size = 0x4, scoped, tag = 'scoped memory for tpu_custom_call.1']
    #allocation8 [shape = 'u8[4096]{0}', space=vmem, size = 0x1000, scoped, tag = 'output window, operand 0, single buffered']
    %8 = vsyncpa [#allocation4], 0
    %9 = vsyncpa [#allocation7], 0
    %10 = vsyncpa [#allocation5], 0
    // Predicated region
    $region2: #{tpu_custom_call.1} parent=1 // pred_check
      _
    $region3: #{tpu_custom_call.1} parent=1 // pred_check_branch
      %12 = sbr.rel (0) target = $region5
    $region4: #{tpu_custom_call.1} parent=1 // pred_region
      %s14 = ssub.s32 128, 128
      %15 = vsyncadd [#allocation4], %s14
      %s16 = sshll.u32 [#allocation3], 4
      %s17 = int_to_ptr.vmem [resolvable:$true] %s16
      %22 = dma.hbm_to_vmem [thread:$0]  %s0, 128, %s17, [#allocation4], 64, 64, 4
    $region5: #{tpu_custom_call.1} parent=1 // pred_fallthru
      _
    // Predicated region
    $region6: #{tpu_custom_call.1} parent=1 // pred_check
      _
    $region7: #{tpu_custom_call.1} parent=1 // pred_check_branch
      %24 = sbr.rel (0) target = $region9
    $region8: #{tpu_custom_call.1} parent=1 // pred_region
      %s26 = ssub.s32 1024, 1024
      %27 = vsyncadd [#allocation7], %s26
      %s28 = sshll.u32 [#allocation6], 4
      %s29 = int_to_ptr.vmem [resolvable:$true] %s28
      %34 = dma.hbm_to_vmem [thread:$0]  %s1, 1024, %s29, [#allocation7], 64, 64, 4
    $region9: #{tpu_custom_call.1} parent=1 // pred_fallthru
      _
    // Predicated region
    $region10: #{tpu_custom_call.1} parent=1 // pred_check
      _
    $region11: #{tpu_custom_call.1} parent=1 // pred_check_branch
      %36 = sbr.rel (0) target = $region13
    $region12: #{tpu_custom_call.1} parent=1 // pred_region
      _
    $region13: #{tpu_custom_call.1} parent=1 // pred_fallthru
      _
    // Predicated region
    $region14: #{tpu_custom_call.1} parent=1 // pred_check
      _
    $region15: #{tpu_custom_call.1} parent=1 // pred_check_branch
      %38 = sbr.rel (0) target = $region17
    $region16: #{tpu_custom_call.1} parent=1 // pred_region
      %39 = dma.done [#allocation4], 128
    $region17: #{tpu_custom_call.1} parent=1 // pred_fallthru
      _
    // Predicated region
    $region18: #{tpu_custom_call.1} parent=1 // pred_check
      _
    $region19: #{tpu_custom_call.1} parent=1 // pred_check_branch
      %41 = sbr.rel (0) target = $region21
    $region20: #{tpu_custom_call.1} parent=1 // pred_region
      %42 = dma.done [#allocation7], 1024
    $region21: #{tpu_custom_call.1} parent=1 // pred_fallthru
      _
    %p44 = scmp.eq.s32.totalorder 0, 0
    // Predicated region
    $region22: #{tpu_custom_call.1} parent=1 // pred_check
      %p45 = pneg %p44
    $region23: #{tpu_custom_call.1} parent=1 // pred_check_branch
      %47 = sbr.rel (%p45) target = $region25
    $region24: #{tpu_custom_call.1} parent=1 // pred_region
      %48 = vst [vmem:[#allocation2] sm:$0xff] 0.0
      %49 = vst [vmem:[#allocation2 + $0x8] sm:$0xff] 0.0
    $region25: #{tpu_custom_call.1} parent=1 // pred_fallthru
      _
    %v50 = vld [vmem:[#allocation2] sm:$0xff]
    %v51 = vld [vmem:[#allocation2 + $0x8] sm:$0xff]
    %v52 = vld [vmem:[#allocation3] sm:$0xf]
    %v53 = vld [vmem:[#allocation3 + $0x4] sm:$0xf]
    %v54 = vld [vmem:[#allocation6] sm:$0xf]
    %v55 = vld [vmem:[#allocation6 + $0x4] sm:$0xf]
    %v56 = vld [vmem:[#allocation6 + $0x8] sm:$0xf]
    %v57 = vld [vmem:[#allocation6 + $0xc] sm:$0xf]
    %v58 = vld [vmem:[#allocation6 + $0x10] sm:$0xf]
    %v59 = vld [vmem:[#allocation6 + $0x14] sm:$0xf]
    %v60 = vld [vmem:[#allocation6 + $0x18] sm:$0xf]
    %v61 = vld [vmem:[#allocation6 + $0x1c] sm:$0xf]
    %v62 = vld [vmem:[#allocation6 + $0x20] sm:$0xf]
    %v63 = vld [vmem:[#allocation6 + $0x24] sm:$0xf]
    %v64 = vld [vmem:[#allocation6 + $0x28] sm:$0xf]
    %v65 = vld [vmem:[#allocation6 + $0x2c] sm:$0xf]
    %v66 = vld [vmem:[#allocation6 + $0x30] sm:$0xf]
    %v67 = vld [vmem:[#allocation6 + $0x34] sm:$0xf]
    %v68 = vld [vmem:[#allocation6 + $0x38] sm:$0xf]
    %v69 = vld [vmem:[#allocation6 + $0x3c] sm:$0xf]
    %v72 = vunpack.c.l.b16 %v52
    %v73 = vunpack.c.l.b16 %v53
    %v74 = vpack.c.b16 %v73, %v72
    %v92 = vunpack.c.l.b16 %v54
    %v93 = vunpack.c.l.b16 %v55
    %v94 = vunpack.c.l.b16 %v56
    %v95 = vunpack.c.l.b16 %v57
    %v96 = vunpack.c.l.b16 %v58
    %v97 = vunpack.c.l.b16 %v59
    %v98 = vunpack.c.l.b16 %v60
    %v99 = vunpack.c.l.b16 %v61
    %v100 = vunpack.c.l.b16 %v62
    %v101 = vunpack.c.l.b16 %v63
    %v102 = vunpack.c.l.b16 %v64
    %v103 = vunpack.c.l.b16 %v65
    %v104 = vunpack.c.l.b16 %v66
    %v105 = vunpack.c.l.b16 %v67
    %v106 = vunpack.c.l.b16 %v68
    %v107 = vunpack.c.l.b16 %v69
    %v108 = vpack.c.b16 %v93, %v92
    %v109 = vpack.c.b16 %v95, %v94
    %v110 = vpack.c.b16 %v97, %v96
    %v111 = vpack.c.b16 %v99, %v98
    %v112 = vpack.c.b16 %v101, %v100
    %v113 = vpack.c.b16 %v103, %v102
    %v114 = vpack.c.b16 %v105, %v104
    %v115 = vpack.c.b16 %v107, %v106
    %124 = vmatprep.subr.bf16.mxu0 0
    %125 = vmatpush1.bf16.msra.mxu0 %v115
    %126 = vmatprep.subr.bf16.mxu0 0
    %127 = vmatpush1.bf16.msra.mxu0 %v114
    %128 = vmatprep.subr.bf16.mxu0 0
    %129 = vmatpush1.bf16.msra.mxu0 %v113
    %130 = vmatprep.subr.bf16.mxu0 0
    %131 = vmatpush1.bf16.msra.mxu0 %v112
    %132 = vmatprep.subr.bf16.mxu0 0
    %133 = vmatpush1.bf16.msra.mxu0 %v111
    %134 = vmatprep.subr.bf16.mxu0 0
    %135 = vmatpush1.bf16.msra.mxu0 %v110
    %136 = vmatprep.subr.bf16.mxu0 0
    %137 = vmatpush1.bf16.msra.mxu0 %v109
    %138 = vmatprep.subr.bf16.mxu0 0
    %139 = vmatpush1.bf16.msra.mxu0 %v108
    %140 = vmatprep.subr.bf16.mxu0 0
    %141 = vmatpush2.bf16.msra.mxu0 0
    %142 = vmatprep.subr.bf16.mxu0 0
    %143 = vmatpush2.bf16.msra.mxu0 0
    %144 = vmatprep.subr.bf16.mxu0 0
    %145 = vmatpush2.bf16.msra.mxu0 0
    %146 = vmatprep.subr.bf16.mxu0 0
    %147 = vmatpush2.bf16.msra.mxu0 0
    %148 = vmatprep.subr.bf16.mxu0 0
    %149 = vmatpush2.bf16.msra.mxu0 0
    %150 = vmatprep.subr.bf16.mxu0 0
    %151 = vmatpush2.bf16.msra.mxu0 0
    %152 = vmatprep.subr.bf16.mxu0 0
    %153 = vmatpush2.bf16.msra.mxu0 0
    %154 = vmatprep.subr.bf16.mxu0 0
    %155 = vmatpush2.bf16.msra.mxu0 0
    %156 = vmatprep.mubr.bf16.mxu0 0
    %157 = vmatmul.mubr.bf16.gmra.mxu0 %v74
    %v158 = vpop.f32.mrf.mxu0
    %v159 = vadd.f32 0.0, %v158
    %v160 = vpop.f32.mrf.mxu0
    %v161 = vpop.f32.mrf.mxu0
    %v162 = vadd.f32 0.0, %v161
    %v163 = vpop.f32.mrf.mxu0
    %164 = vdwg.mxu0
    %v165 = vadd.f32 %v50, %v159
    %v166 = vadd.f32 %v51, %v162
    %167 = vst [vmem:[#allocation2] sm:$0xff] %v165
    %168 = vst [vmem:[#allocation2 + $0x8] sm:$0xff] %v166
    // Predicated region
    $region26: #{tpu_custom_call.1} parent=1 // pred_check
      %p169 = pneg %p44
    $region27: #{tpu_custom_call.1} parent=1 // pred_check_branch
      %171 = sbr.rel (%p169) target = $region29
    $region28: #{tpu_custom_call.1} parent=1 // pred_region
      %v172 = vld [vmem:[#allocation2] sm:$0xff]
      %v173 = vld [vmem:[#allocation2 + $0x8] sm:$0xff]
      %v174 = vld [vmem:[%s2] sm:$0x1]
      %v176 = vlaneseq
      %v177 = vshrl.u32 %v176, 7
      %v178 = vsub.s32 0, %v177
      %v179 = vrot.slane %v174, %v178
      %v181 = vadd.f32 %v172, %v179
      %v182 = vadd.f32 %v173, %v179
      %v183 = vpack.c.bf16 %v182, %v181
      %v185 = vunpack.c.l.b16 %v183
      %v186 = vunpack.c.h.b16 %v183
      %v187 = vpack.c.b16 %v185, %v185
      %v188 = vpack.c.b16 %v186, %v186
      %191 = vst [vmem:[#allocation8] sm:$0xf] %v187
      %192 = vst [vmem:[#allocation8 + $0x4] sm:$0xf] %v188
    $region29: #{tpu_custom_call.1} parent=1 // pred_fallthru
      _
    // Predicated region
    $region30: #{tpu_custom_call.1} parent=1 // pred_check
      _
    $region31: #{tpu_custom_call.1} parent=1 // pred_check_branch
      %194 = sbr.rel (0) target = $region33
    $region32: #{tpu_custom_call.1} parent=1 // pred_region
      %s196 = ssub.s32 128, 128
      %197 = vsyncadd [#allocation5], %s196
      %s198 = sshll.u32 [#allocation8], 4
      %s199 = int_to_ptr.vmem [resolvable:$true] %s198
      %204 = dma.vmem_to_hbm [thread:$0]  %s199, 128, %s3, [#allocation5], 64, 64, 4
    $region33: #{tpu_custom_call.1} parent=1 // pred_fallthru
      _
    // Predicated region
    $region34: #{tpu_custom_call.1} parent=1 // pred_check
      _
    $region35: #{tpu_custom_call.1} parent=1 // pred_check_branch
      %206 = sbr.rel (0) target = $region37
    $region36: #{tpu_custom_call.1} parent=1 // pred_region
      %207 = dma.done [#allocation5], 128
    $region37: #{tpu_custom_call.1} parent=1 // pred_fallthru
      _
    %208 = vsyncpa [#allocation4], 1
    %209 = vsyncpa [#allocation7], 1
    %210 = vsyncpa [#allocation5], 1

</llo_original>
